<compile_context>
chip_gen: v5e
topology: v5e:2x2
jax: 0.10.0
libtpu: 0.0.40
codegen_flags: <defaults>
</compile_context>

<pallas_src>
import functools

import jax
import jax.numpy as jnp
from jax.experimental import pallas as pl
from jax.experimental.pallas import tpu as pltpu

HIDDEN = 256
LANE = 128


# --------------------------------------------------------------------------- #
# Kernel
# --------------------------------------------------------------------------- #
def _mlp_kernel(x_ref,
                w0_ref, b0_ref,
                w1_ref, b1_ref,
                w2_ref, b2_ref,
                w3_ref, b3_ref,
                o_ref):
    """Fused 4-layer MLP for one batch tile. bf16 MXU inputs, f32 accumulation."""
    cdt = w0_ref.dtype  # compute dtype for MXU inputs (bf16)

    # In-kernel cast of the f32 input tile (saves a separate XLA cast pass over HBM).
    x = x_ref[...].astype(cdt)

    h = jnp.dot(x, w0_ref[...], preferred_element_type=jnp.float32) + b0_ref[...]
    h = jnp.maximum(h, 0.0).astype(cdt)

    h = jnp.dot(h, w1_ref[...], preferred_element_type=jnp.float32) + b1_ref[...]
    h = jnp.maximum(h, 0.0).astype(cdt)

    h = jnp.dot(h, w2_ref[...], preferred_element_type=jnp.float32) + b2_ref[...]
    h = jnp.maximum(h, 0.0).astype(cdt)

    out = jnp.dot(h, w3_ref[...], preferred_element_type=jnp.float32) + b3_ref[...]
    o_ref[...] = out.astype(o_ref.dtype)


# --------------------------------------------------------------------------- #
# Planning helpers
# --------------------------------------------------------------------------- #
def _round_up(x, m):
    return ((x + m - 1) // m) * m


def _tpu_generation_info():
    """(vmem_capacity_bytes, num_tensorcores) with conservative fallbacks."""
    vmem_cap = 64 * 1024 * 1024  # conservative: v7x per-TC physical VMEM
    try:
        info = pltpu.get_tpu_info()
        vmem_cap = int(getattr(info, "vmem_capacity_bytes", vmem_cap))
    except Exception:
        pass
    num_tc = 1
    try:
        kind = jax.devices()[0].device_kind.lower()
        # v7x and v4/v5p megacore chips have 2 TensorCores that the "parallel"
        # grid axis shards across; v5e/v6e are single-TC (grid = serial loop).
        if any(tag in kind for tag in ("7", "v4", "v5p")):
            num_tc = 2
    except Exception:
        pass
    return vmem_cap, num_tc


def _plan_tiles(batch, in_dim, out_pad, block_m_cap):
    """Pick an MXU/lane-aligned batch tile and a right-sized scoped-VMEM limit."""
    vmem_cap, num_tc = _tpu_generation_info()

    # Weights + biases resident every step (double-buffered by default).
    w_elems = in_dim * HIDDEN + 2 * HIDDEN * HIDDEN + HIDDEN * out_pad
    b_elems = 3 * HIDDEN + out_pad
    fixed = 2 * (w_elems * 2 + b_elems * 4)  # bf16 weights, f32 biases, x2 buffers

    # Per batch row: double-buffered f32 x tile + f32 out tile, plus ~4 f32
    # [row, HIDDEN] intermediates (h activations / their bf16 recasts).
    per_row = 2 * (in_dim * 4 + out_pad * 4) + 4 * HIDDEN * 4

    budget = int(vmem_cap * 0.75) - fixed - (4 << 20)
    bm = max(LANE, min(block_m_cap, (budget // per_row) // LANE * LANE))
    # No larger than the (lane-aligned) batch needs.
    bm = min(bm, _round_up(batch, LANE))
    # On 2-TC chips keep >= 2 parallel grid steps when the batch allows it.
    if num_tc >= 2 and batch >= 2 * LANE:
        bm = min(bm, _round_up(pl.cdiv(batch, num_tc), LANE))

    # Scoped VMEM limit: actual working set + slack, capped below physical.
    need = fixed + bm * per_row + (8 << 20)
    vmem_limit = int(min(max(need, 32 << 20), vmem_cap - (8 << 20)))
    return bm, vmem_limit


# --------------------------------------------------------------------------- #
# Wrapper
# --------------------------------------------------------------------------- #
def prepare_params(params, compute_dtype=jnp.bfloat16):
    """Cast weights to bf16 and lane-pad the final layer once (outside per-call path)."""
    out_dim = params["w3"].shape[1]
    out_pad = _round_up(out_dim, LANE)
    prepped = {}
    for i in range(4):
        w = jnp.asarray(params[f"w{i}"], compute_dtype)
        b = jnp.asarray(params[f"b{i}"], jnp.float32)
        if i == 3 and out_pad != out_dim:
            w = jnp.pad(w, ((0, 0), (0, out_pad - out_dim)))
            b = jnp.pad(b, ((0, 0), (0, out_pad - out_dim)))
        prepped[f"w{i}"] = w
        prepped[f"b{i}"] = b
    return prepped, out_dim


@functools.partial(jax.jit, static_argnames=("out_dim", "block_m", "vmem_limit"))
def _forward(x, prepped, *, out_dim, block_m, vmem_limit):
    B, in_dim = x.shape
    out_pad = prepped["w3"].shape[1]

    Bp = _round_up(B, block_m)
    xp = jnp.pad(x, ((0, Bp - B), (0, 0))) if Bp != B else x

    def full_spec(shape):
        # Whole-array block (weights/biases resident in VMEM for every step).
        return pl.BlockSpec(shape, lambda i: (0, 0))

    in_specs = [pl.BlockSpec((block_m, in_dim), lambda i: (i, 0))]
    for i in range(4):
        in_specs.append(full_spec(prepped[f"w{i}"].shape))
        in_specs.append(full_spec(prepped[f"b{i}"].shape))

    out = pl.pallas_call(
        _mlp_kernel,
        out_shape=jax.ShapeDtypeStruct((Bp, out_pad), jnp.float32),
        grid=(Bp // block_m,),
        in_specs=in_specs,
        out_specs=pl.BlockSpec((block_m, out_pad), lambda i: (i, 0)),
        compiler_params=pltpu.CompilerParams(
            dimension_semantics=("parallel",),
            vmem_limit_bytes=vmem_limit,
        ),
    )(xp,
      prepped["w0"], prepped["b0"],
      prepped["w1"], prepped["b1"],
      prepped["w2"], prepped["b2"],
      prepped["w3"], prepped["b3"])

    return out[:B, :out_dim]


def feedforward_nn(x, prepped_params, out_dim, *, block_m_cap=4096):
    """Forward pass of FeedForwardNN.

    x: [B, in_dim] float32
    prepped_params: output of prepare_params() (bf16 weights, lane-padded layer 3).
    Returns [B, out_dim] float32.
    """
    B, in_dim = x.shape
    out_pad = prepped_params["w3"].shape[1]
    bm, vmem_limit = _plan_tiles(B, in_dim, out_pad, block_m_cap)
    return _forward(x, prepped_params, out_dim=out_dim, block_m=bm,
                    vmem_limit=vmem_limit)


# --------------------------------------------------------------------------- #
# Init / reference / test
# --------------------------------------------------------------------------- #
def init_params(key, in_dim, out_dim):
    """Deterministic init mimicking torch.nn.Linear (U(-1/sqrt(fan_in), 1/sqrt(fan_in)))."""
    dims = [(in_dim, HIDDEN), (HIDDEN, HIDDEN), (HIDDEN, HIDDEN), (HIDDEN, out_dim)]
    params = {}
    for idx, (fan_in, fan_out) in enumerate(dims):
        key, kw, kb = jax.random.split(key, 3)
        bound = 1.0 / jnp.sqrt(jnp.float32(fan_in))
        params[f"w{idx}"] = jax.random.uniform(
            kw, (fan_in, fan_out), jnp.float32, -bound, bound)
        params[f"b{idx}"] = jax.random.uniform(
            kb, (1, fan_out), jnp.float32, -bound, bound)
    return params


def _reference(x, params, compute_dtype=jnp.bfloat16):
    """Pure-JAX reference applying the same bf16-input / f32-accumulate recipe."""
    h = x.astype(compute_dtype)
    for i in range(3):
        w = params[f"w{i}"].astype(compute_dtype)
        h = jnp.dot(h, w, preferred_element_type=jnp.float32) + params[f"b{i}"]
        h = jnp.maximum(h, 0.0).astype(compute_dtype)
    w = params["w3"].astype(compute_dtype)
    return jnp.dot(h, w, preferred_element_type=jnp.float32) + params["b3"]


if __name__ == "__main__":
    key = jax.random.PRNGKey(0)
    in_dim, out_dim, batch = 16, 8, 8

    kx, kp = jax.random.split(key)
    x = jax.random.normal(kx, (batch, in_dim), dtype=jnp.float32)
    params = init_params(kp, in_dim, out_dim)

    prepped, real_out_dim = prepare_params(params)
    out = feedforward_nn(x, prepped, real_out_dim)
    out = jax.block_until_ready(out)

    ref = _reference(x, params)
    assert out.shape == (batch, out_dim)
    assert jnp.allclose(out, ref, atol=1e-2, rtol=1e-2)

    print("KERNEL_OK")
</pallas_src>

<mosaic_0001>
module attributes {stable_mosaic.version = 11 : i64} {
  func.func @_mlp_kernel(%arg0: i32, %arg1: memref<128x16xf32, #tpu.memory_space<vmem>>, %arg2: memref<16x256xbf16, #tpu.memory_space<vmem>>, %arg3: memref<1x256xf32, #tpu.memory_space<vmem>>, %arg4: memref<256x256xbf16, #tpu.memory_space<vmem>>, %arg5: memref<1x256xf32, #tpu.memory_space<vmem>>, %arg6: memref<256x256xbf16, #tpu.memory_space<vmem>>, %arg7: memref<1x256xf32, #tpu.memory_space<vmem>>, %arg8: memref<256x128xbf16, #tpu.memory_space<vmem>>, %arg9: memref<1x128xf32, #tpu.memory_space<vmem>>, %arg10: memref<128x128xf32, #tpu.memory_space<vmem>>) attributes {dimension_semantics = [#tpu.dimension_semantics<parallel>], iteration_bounds = array<i64: 1>, scalar_prefetch = 0 : i64, scratch_operands = 0 : i64, tpu.core_type = #tpu.core_type<tc>, window_params = [{transform_indices = @transform_0, window_bounds = array<i64: 128, 16>}, {pipeline_mode = #tpu.pipeline_mode<synchronous>, transform_indices = @transform_1, window_bounds = array<i64: 16, 256>}, {pipeline_mode = #tpu.pipeline_mode<synchronous>, transform_indices = @transform_2, window_bounds = array<i64: 1, 256>}, {pipeline_mode = #tpu.pipeline_mode<synchronous>, transform_indices = @transform_3, window_bounds = array<i64: 256, 256>}, {pipeline_mode = #tpu.pipeline_mode<synchronous>, transform_indices = @transform_4, window_bounds = array<i64: 1, 256>}, {pipeline_mode = #tpu.pipeline_mode<synchronous>, transform_indices = @transform_5, window_bounds = array<i64: 256, 256>}, {pipeline_mode = #tpu.pipeline_mode<synchronous>, transform_indices = @transform_6, window_bounds = array<i64: 1, 256>}, {pipeline_mode = #tpu.pipeline_mode<synchronous>, transform_indices = @transform_7, window_bounds = array<i64: 256, 128>}, {pipeline_mode = #tpu.pipeline_mode<synchronous>, transform_indices = @transform_8, window_bounds = array<i64: 1, 128>}, {transform_indices = @transform_9, window_bounds = array<i64: 128, 128>}]} {
    %c0 = arith.constant 0 : index
    %c0_0 = arith.constant 0 : index
    %0 = vector.load %arg1[%c0, %c0_0] : memref<128x16xf32, #tpu.memory_space<vmem>>, vector<128x16xf32>
    %1 = arith.truncf %0 : vector<128x16xf32> to vector<128x16xbf16>
    %c0_1 = arith.constant 0 : index
    %c0_2 = arith.constant 0 : index
    %2 = vector.load %arg2[%c0_1, %c0_2] : memref<16x256xbf16, #tpu.memory_space<vmem>>, vector<16x256xbf16>
    %cst = arith.constant dense<0.000000e+00> : vector<128x256xf32>
    %3 = tpu.matmul %1, %2, %cst {dimension_numbers = #tpu.dot_dimension_numbers<[1], [0], [0], [1], [0, 0, 1, 1], [], []>} : vector<128x16xbf16>, vector<16x256xbf16>, vector<128x256xf32> -> vector<128x256xf32>
    %c0_3 = arith.constant 0 : index
    %c0_4 = arith.constant 0 : index
    %4 = vector.load %arg3[%c0_3, %c0_4] : memref<1x256xf32, #tpu.memory_space<vmem>>, vector<1x256xf32>
    %5 = vector.broadcast %4 : vector<1x256xf32> to vector<128x256xf32>
    %6 = arith.addf %3, %5 : vector<128x256xf32>
    %cst_5 = arith.constant 0.000000e+00 : f32
    %7 = vector.broadcast %cst_5 : f32 to vector<128x256xf32>
    %8 = arith.maximumf %6, %7 : vector<128x256xf32>
    %9 = arith.truncf %8 : vector<128x256xf32> to vector<128x256xbf16>
    %c0_6 = arith.constant 0 : index
    %c0_7 = arith.constant 0 : index
    %10 = vector.load %arg4[%c0_6, %c0_7] : memref<256x256xbf16, #tpu.memory_space<vmem>>, vector<256x256xbf16>
    %cst_8 = arith.constant dense<0.000000e+00> : vector<128x256xf32>
    %11 = tpu.matmul %9, %10, %cst_8 {dimension_numbers = #tpu.dot_dimension_numbers<[1], [0], [0], [1], [0, 0, 1, 1], [], []>} : vector<128x256xbf16>, vector<256x256xbf16>, vector<128x256xf32> -> vector<128x256xf32>
    %c0_9 = arith.constant 0 : index
    %c0_10 = arith.constant 0 : index
    %12 = vector.load %arg5[%c0_9, %c0_10] : memref<1x256xf32, #tpu.memory_space<vmem>>, vector<1x256xf32>
    %13 = vector.broadcast %12 : vector<1x256xf32> to vector<128x256xf32>
    %14 = arith.addf %11, %13 : vector<128x256xf32>
    %cst_11 = arith.constant 0.000000e+00 : f32
    %15 = vector.broadcast %cst_11 : f32 to vector<128x256xf32>
    %16 = arith.maximumf %14, %15 : vector<128x256xf32>
    %17 = arith.truncf %16 : vector<128x256xf32> to vector<128x256xbf16>
    %c0_12 = arith.constant 0 : index
    %c0_13 = arith.constant 0 : index
    %18 = vector.load %arg6[%c0_12, %c0_13] : memref<256x256xbf16, #tpu.memory_space<vmem>>, vector<256x256xbf16>
    %cst_14 = arith.constant dense<0.000000e+00> : vector<128x256xf32>
    %19 = tpu.matmul %17, %18, %cst_14 {dimension_numbers = #tpu.dot_dimension_numbers<[1], [0], [0], [1], [0, 0, 1, 1], [], []>} : vector<128x256xbf16>, vector<256x256xbf16>, vector<128x256xf32> -> vector<128x256xf32>
    %c0_15 = arith.constant 0 : index
    %c0_16 = arith.constant 0 : index
    %20 = vector.load %arg7[%c0_15, %c0_16] : memref<1x256xf32, #tpu.memory_space<vmem>>, vector<1x256xf32>
    %21 = vector.broadcast %20 : vector<1x256xf32> to vector<128x256xf32>
    %22 = arith.addf %19, %21 : vector<128x256xf32>
    %cst_17 = arith.constant 0.000000e+00 : f32
    %23 = vector.broadcast %cst_17 : f32 to vector<128x256xf32>
    %24 = arith.maximumf %22, %23 : vector<128x256xf32>
    %25 = arith.truncf %24 : vector<128x256xf32> to vector<128x256xbf16>
    %c0_18 = arith.constant 0 : index
    %c0_19 = arith.constant 0 : index
    %26 = vector.load %arg8[%c0_18, %c0_19] : memref<256x128xbf16, #tpu.memory_space<vmem>>, vector<256x128xbf16>
    %cst_20 = arith.constant dense<0.000000e+00> : vector<128x128xf32>
    %27 = tpu.matmul %25, %26, %cst_20 {dimension_numbers = #tpu.dot_dimension_numbers<[1], [0], [0], [1], [0, 0, 1, 1], [], []>} : vector<128x256xbf16>, vector<256x128xbf16>, vector<128x128xf32> -> vector<128x128xf32>
    %c0_21 = arith.constant 0 : index
    %c0_22 = arith.constant 0 : index
    %28 = vector.load %arg9[%c0_21, %c0_22] : memref<1x128xf32, #tpu.memory_space<vmem>>, vector<1x128xf32>
    %29 = vector.broadcast %28 : vector<1x128xf32> to vector<128x128xf32>
    %30 = arith.addf %27, %29 : vector<128x128xf32>
    %c0_23 = arith.constant 0 : index
    %c0_24 = arith.constant 0 : index
    %31 = vector.load %arg10[%c0_23, %c0_24] : memref<128x128xf32, #tpu.memory_space<vmem>>, vector<128x128xf32>
    tpu.vector_store %arg10[%c0_23, %c0_24], %30 {strides = array<i32>} : memref<128x128xf32, #tpu.memory_space<vmem>>, vector<128x128xf32>,
    return
  }
  func.func @transform_0(%arg0: i32) -> (i32, i32) {
    %c0_i32 = arith.constant 0 : i32
    %c0_i32_0 = arith.constant 0 : i32
    return %arg0, %c0_i32 : i32, i32
  }
  func.func @transform_1(%arg0: i32) -> (i32, i32) {
    %c0_i32 = arith.constant 0 : i32
    %c0_i32_0 = arith.constant 0 : i32
    %c0_i32_1 = arith.constant 0 : i32
    return %c0_i32, %c0_i32_0 : i32, i32
  }
  func.func @transform_2(%arg0: i32) -> (i32, i32) {
    %c0_i32 = arith.constant 0 : i32
    %c0_i32_0 = arith.constant 0 : i32
    %c0_i32_1 = arith.constant 0 : i32
    return %c0_i32, %c0_i32_0 : i32, i32
  }
  func.func @transform_3(%arg0: i32) -> (i32, i32) {
    %c0_i32 = arith.constant 0 : i32
    %c0_i32_0 = arith.constant 0 : i32
    %c0_i32_1 = arith.constant 0 : i32
    return %c0_i32, %c0_i32_0 : i32, i32
  }
  func.func @transform_4(%arg0: i32) -> (i32, i32) {
    %c0_i32 = arith.constant 0 : i32
    %c0_i32_0 = arith.constant 0 : i32
    %c0_i32_1 = arith.constant 0 : i32
    return %c0_i32, %c0_i32_0 : i32, i32
  }
  func.func @transform_5(%arg0: i32) -> (i32, i32) {
    %c0_i32 = arith.constant 0 : i32
    %c0_i32_0 = arith.constant 0 : i32
    %c0_i32_1 = arith.constant 0 : i32
    return %c0_i32, %c0_i32_0 : i32, i32
  }
  func.func @transform_6(%arg0: i32) -> (i32, i32) {
    %c0_i32 = arith.constant 0 : i32
    %c0_i32_0 = arith.constant 0 : i32
    %c0_i32_1 = arith.constant 0 : i32
    return %c0_i32, %c0_i32_0 : i32, i32
  }
  func.func @transform_7(%arg0: i32) -> (i32, i32) {
    %c0_i32 = arith.constant 0 : i32
    %c0_i32_0 = arith.constant 0 : i32
    %c0_i32_1 = arith.constant 0 : i32
    return %c0_i32, %c0_i32_0 : i32, i32
  }
  func.func @transform_8(%arg0: i32) -> (i32, i32) {
    %c0_i32 = arith.constant 0 : i32
    %c0_i32_0 = arith.constant 0 : i32
    %c0_i32_1 = arith.constant 0 : i32
    return %c0_i32, %c0_i32_0 : i32, i32
  }
  func.func @transform_9(%arg0: i32) -> (i32, i32) {
    %c0_i32 = arith.constant 0 : i32
    %c0_i32_0 = arith.constant 0 : i32
    return %arg0, %c0_i32 : i32, i32
  }
}

</mosaic_0001>

<llo_original>
// kernel: _forward.1
$region0: #{_forward.1}
  #allocation0 [shape = 'u32[]', space=smem, size = 0x4, offset = 0x4, fixed_abs, tag = 'smem constant byte address 0x4 - core index']
  #allocation1 [shape = 'u32[72,128]{1,0:T(1,128)}', space=vmem, size = 0x9000, scoped, tag = 'internal scratch']
  %s0 = inlined_call_operand.vmem [shape: f32[128,16], index: 0, kind: input, shape index: {}]
  %s1 = inlined_call_operand.vmem [shape: bf16[16,256], index: 1, kind: input, shape index: {}]
  %s2 = inlined_call_operand.hbm [shape: f32[1,256], index: 2, kind: input, shape index: {}]
  %s3 = inlined_call_operand.hbm [shape: bf16[256,256], index: 3, kind: input, shape index: {}]
  %s4 = inlined_call_operand.hbm [shape: f32[1,256], index: 4, kind: input, shape index: {}]
  %s5 = inlined_call_operand.hbm [shape: bf16[256,256], index: 5, kind: input, shape index: {}]
  %s6 = inlined_call_operand.hbm [shape: f32[1,256], index: 6, kind: input, shape index: {}]
  %s7 = inlined_call_operand.vmem [shape: bf16[256,128], index: 7, kind: input, shape index: {}]
  %s8 = inlined_call_operand.hbm [shape: f32[1,128], index: 8, kind: input, shape index: {}]
  %s9 = inlined_call_operand.vmem [shape: f32[128,128], index: 9, kind: output, shape index: {}]
  %s10 = sld [smem:[#allocation0]]
  $region70: #{_forward.1} parent=0
    _
  %s12 = ssub.s32 1, %s10
  %s13 = scalar_select 0, %s12, %s10
  $region1: #{_forward.1} parent=0
    #allocation2 [shape = 'u8[1024]{0}', space=vmem, size = 0x400, scoped, tag = 'input window, operand 2, single buffered']
    #allocation3 [shape = 's32[1]{0}', space=sflag, size = 0x4, scoped, tag = 'scoped memory for _forward.1']
    #allocation4 [shape = 'u8[131072]{0}', space=vmem, size = 0x20000, scoped, tag = 'input window, operand 3, single buffered']
    #allocation5 [shape = 's32[1]{0}', space=sflag, size = 0x4, scoped, tag = 'scoped memory for _forward.1']
    #allocation6 [shape = 'u8[1024]{0}', space=vmem, size = 0x400, scoped, tag = 'input window, operand 4, single buffered']
    #allocation7 [shape = 'u8[131072]{0}', space=vmem, size = 0x20000, scoped, tag = 'input window, operand 5, single buffered']
    #allocation8 [shape = 's32[1]{0}', space=sflag, size = 0x4, scoped, tag = 'scoped memory for _forward.1']
    #allocation9 [shape = 'u8[1024]{0}', space=vmem, size = 0x400, scoped, tag = 'input window, operand 6, single buffered']
    #allocation10 [shape = 'u8[512]{0}', space=vmem, size = 0x400, scoped, tag = 'input window, operand 8, single buffered']
    #allocation11 [shape = 's32[1]{0}', space=sflag, size = 0x4, scoped, tag = 'scoped memory for _forward.1']
    %14 = vsyncpa [#allocation3], 0
    %15 = vsyncpa [#allocation5], 0
    %16 = vsyncpa [#allocation8], 0
    %17 = vsyncpa [#allocation11], 0
    // Predicated region
    $region2: #{_forward.1} parent=1 // pred_check
      _
    $region3: #{_forward.1} parent=1 // pred_check_branch
      %19 = sbr.rel (0) target = $region5
    $region4: #{_forward.1} parent=1 // pred_region
      _
    $region5: #{_forward.1} parent=1 // pred_fallthru
      _
    // Predicated region
    $region6: #{_forward.1} parent=1 // pred_check
      _
    $region7: #{_forward.1} parent=1 // pred_check_branch
      %21 = sbr.rel (0) target = $region9
    $region8: #{_forward.1} parent=1 // pred_region
      _
    $region9: #{_forward.1} parent=1 // pred_fallthru
      _
    // Predicated region
    $region10: #{_forward.1} parent=1 // pred_check
      _
    $region11: #{_forward.1} parent=1 // pred_check_branch
      %23 = sbr.rel (0) target = $region13
    $region12: #{_forward.1} parent=1 // pred_region
      %25 = vsyncadd [#allocation3], 0
      %s27 = sshll.u32 %s2, 4
      %s28 = int_to_ptr.hbm [resolvable:$true] %s27
      %s29 = sshll.u32 [#allocation2], 4
      %s30 = int_to_ptr.vmem [resolvable:$true] %s29
      %32 = dma.hbm_to_vmem [thread:$0]  %s28, 32, %s30, [#allocation3]
    $region13: #{_forward.1} parent=1 // pred_fallthru
      _
    // Predicated region
    $region14: #{_forward.1} parent=1 // pred_check
      _
    $region15: #{_forward.1} parent=1 // pred_check_branch
      %34 = sbr.rel (0) target = $region17
    $region16: #{_forward.1} parent=1 // pred_region
      %36 = vsyncadd [#allocation5], 0
      %s37 = sshll.u32 %s3, 4
      %s38 = int_to_ptr.hbm [resolvable:$true] %s37
      %s39 = sshll.u32 [#allocation4], 4
      %s40 = int_to_ptr.vmem [resolvable:$true] %s39
      %45 = dma.hbm_to_vmem [thread:$0]  %s38, 4096, %s40, [#allocation5], 128, 128, 8
    $region17: #{_forward.1} parent=1 // pred_fallthru
      _
    // Predicated region
    $region18: #{_forward.1} parent=1 // pred_check
      _
    $region19: #{_forward.1} parent=1 // pred_check_branch
      %47 = sbr.rel (0) target = $region21
    $region20: #{_forward.1} parent=1 // pred_region
      %49 = vsyncadd [#allocation5], 0
      %s51 = sshll.u32 %s4, 4
      %s52 = int_to_ptr.hbm [resolvable:$true] %s51
      %s53 = sshll.u32 [#allocation6], 4
      %s54 = int_to_ptr.vmem [resolvable:$true] %s53
      %56 = dma.hbm_to_vmem [thread:$0]  %s52, 32, %s54, [#allocation5]
    $region21: #{_forward.1} parent=1 // pred_fallthru
      _
    // Predicated region
    $region22: #{_forward.1} parent=1 // pred_check
      _
    $region23: #{_forward.1} parent=1 // pred_check_branch
      %58 = sbr.rel (0) target = $region25
    $region24: #{_forward.1} parent=1 // pred_region
      %60 = vsyncadd [#allocation8], 0
      %s61 = sshll.u32 %s5, 4
      %s62 = int_to_ptr.hbm [resolvable:$true] %s61
      %s63 = sshll.u32 [#allocation7], 4
      %s64 = int_to_ptr.vmem [resolvable:$true] %s63
      %69 = dma.hbm_to_vmem [thread:$0]  %s62, 4096, %s64, [#allocation8], 128, 128, 8
    $region25: #{_forward.1} parent=1 // pred_fallthru
      _
    // Predicated region
    $region26: #{_forward.1} parent=1 // pred_check
      _
    $region27: #{_forward.1} parent=1 // pred_check_branch
      %71 = sbr.rel (0) target = $region29
    $region28: #{_forward.1} parent=1 // pred_region
      %73 = vsyncadd [#allocation8], 0
      %s75 = sshll.u32 %s6, 4
      %s76 = int_to_ptr.hbm [resolvable:$true] %s75
      %s77 = sshll.u32 [#allocation9], 4
      %s78 = int_to_ptr.vmem [resolvable:$true] %s77
      %80 = dma.hbm_to_vmem [thread:$0]  %s76, 32, %s78, [#allocation8]
    $region29: #{_forward.1} parent=1 // pred_fallthru
      _
    // Predicated region
    $region30: #{_forward.1} parent=1 // pred_check
      _
    $region31: #{_forward.1} parent=1 // pred_check_branch
      %82 = sbr.rel (0) target = $region33
    $region32: #{_forward.1} parent=1 // pred_region
      _
    $region33: #{_forward.1} parent=1 // pred_fallthru
      _
    // Predicated region
    $region34: #{_forward.1} parent=1 // pred_check
      _
    $region35: #{_forward.1} parent=1 // pred_check_branch
      %84 = sbr.rel (0) target = $region37
    $region36: #{_forward.1} parent=1 // pred_region
      %86 = vsyncadd [#allocation11], 0
      %s88 = sshll.u32 %s8, 4
      %s89 = int_to_ptr.hbm [resolvable:$true] %s88
      %s90 = sshll.u32 [#allocation10], 4
      %s91 = int_to_ptr.vmem [resolvable:$true] %s90
      %93 = dma.hbm_to_vmem [thread:$0]  %s89, 16, %s91, [#allocation11]
    $region37: #{_forward.1} parent=1 // pred_fallthru
      _
    // Predicated region
    $region38: #{_forward.1} parent=1 // pred_check
      _
    $region39: #{_forward.1} parent=1 // pred_check_branch
      %95 = sbr.rel (0) target = $region41
    $region40: #{_forward.1} parent=1 // pred_region
      %97 = dma.done [#allocation3], 32
    $region41: #{_forward.1} parent=1 // pred_fallthru
      _
    // Predicated region
    $region42: #{_forward.1} parent=1 // pred_check
      _
    $region43: #{_forward.1} parent=1 // pred_check_branch
      %99 = sbr.rel (0) target = $region45
    $region44: #{_forward.1} parent=1 // pred_region
      %101 = dma.done [#allocation5], 4096
    $region45: #{_forward.1} parent=1 // pred_fallthru
      _
    // Predicated region
    $region46: #{_forward.1} parent=1 // pred_check
      _
    $region47: #{_forward.1} parent=1 // pred_check_branch
      %103 = sbr.rel (0) target = $region49
    $region48: #{_forward.1} parent=1 // pred_region
      %105 = dma.done [#allocation5], 32
    $region49: #{_forward.1} parent=1 // pred_fallthru
      _
    // Predicated region
    $region50: #{_forward.1} parent=1 // pred_check
      _
    $region51: #{_forward.1} parent=1 // pred_check_branch
      %107 = sbr.rel (0) target = $region53
    $region52: #{_forward.1} parent=1 // pred_region
      %109 = dma.done [#allocation8], 4096
    $region53: #{_forward.1} parent=1 // pred_fallthru
      _
    // Predicated region
    $region54: #{_forward.1} parent=1 // pred_check
      _
    $region55: #{_forward.1} parent=1 // pred_check_branch
      %111 = sbr.rel (0) target = $region57
    $region56: #{_forward.1} parent=1 // pred_region
      %113 = dma.done [#allocation8], 32
    $region57: #{_forward.1} parent=1 // pred_fallthru
      _
    // Predicated region
    $region58: #{_forward.1} parent=1 // pred_check
      _
    $region59: #{_forward.1} parent=1 // pred_check_branch
      %115 = sbr.rel (0) target = $region61
    $region60: #{_forward.1} parent=1 // pred_region
      %117 = dma.done [#allocation11], 16
    $region61: #{_forward.1} parent=1 // pred_fallthru
      _
    %v119 = vld [vmem:[%s0] sm:$0xff]
    %v120 = vld [vmem:[%s0 + $0x8] sm:$0xff]
    %v121 = vld [vmem:[%s0 + $0x10] sm:$0xff]
    %v122 = vld [vmem:[%s0 + $0x18] sm:$0xff]
    %v123 = vld [vmem:[%s0 + $0x20] sm:$0xff]
    %v124 = vld [vmem:[%s0 + $0x28] sm:$0xff]
    %v125 = vld [vmem:[%s0 + $0x30] sm:$0xff]
    %v126 = vld [vmem:[%s0 + $0x38] sm:$0xff]
    %v127 = vld [vmem:[%s0 + $0x40] sm:$0xff]
    %v128 = vld [vmem:[%s0 + $0x48] sm:$0xff]
    %v129 = vld [vmem:[%s0 + $0x50] sm:$0xff]
    %v130 = vld [vmem:[%s0 + $0x58] sm:$0xff]
    %v131 = vld [vmem:[%s0 + $0x60] sm:$0xff]
    %v132 = vld [vmem:[%s0 + $0x68] sm:$0xff]
    %v133 = vld [vmem:[%s0 + $0x70] sm:$0xff]
    %v134 = vld [vmem:[%s0 + $0x78] sm:$0xff]
    %v135 = vpack.c.bf16 %v120, %v119
    %v136 = vpack.c.bf16 %v122, %v121
    %v137 = vpack.c.bf16 %v124, %v123
    %v138 = vpack.c.bf16 %v126, %v125
    %v139 = vpack.c.bf16 %v128, %v127
    %v140 = vpack.c.bf16 %v130, %v129
    %v141 = vpack.c.bf16 %v132, %v131
    %v142 = vpack.c.bf16 %v134, %v133
    %v143 = vld [vmem:[%s1] sm:$0xff]
    %v144 = vld [vmem:[%s1 + $0x8] sm:$0xff]
    %v145 = vld [vmem:[#allocation2] sm:$0x3]
    %v147 = vperm.slane %v145, 0
    %v148 = vperm.slane %v145, 1
    %v153 = vunpack.c.l.b16 %v143
    %v154 = vunpack.c.h.b16 %v143
    %v155 = vunpack.c.l.b16 %v144
    %v156 = vunpack.c.h.b16 %v144
    %v157 = vpack.c.b16 %v155, %v153
    %v158 = vpack.c.b16 %v156, %v154
    %vm161 = vcmask 130048
    %v163 = vsel %vm161, %v135, 0
    %v166 = vsel %vm161, %v136, 0
    %v169 = vsel %vm161, %v137, 0
    %v172 = vsel %vm161, %v138, 0
    %v175 = vsel %vm161, %v139, 0
    %v178 = vsel %vm161, %v140, 0
    %v181 = vsel %vm161, %v141, 0
    %v184 = vsel %vm161, %v142, 0
    %186 = vmatpush.bf16.msra.mxu0 0
    %187 = vmatpush.bf16.msra.mxu0 0
    %188 = vmatpush.bf16.msra.mxu0 0
    %189 = vmatpush.bf16.msra.mxu0 0
    %190 = vmatpush.bf16.msra.mxu0 0
    %191 = vmatpush.bf16.msra.mxu0 0
    %192 = vmatpush.bf16.msra.mxu0 0
    %193 = vmatpush.bf16.msra.mxu0 %v157
    %194 = vmatmul.bf16.gmra.mxu0 %v163
    %v195 = vpop.f32.mrf.mxu0
    %v196 = vadd.f32 %v147, %v195
    %v197 = vpop.f32.mrf.mxu0
    %v198 = vadd.f32 %v147, %v197
    %199 = vmatmul.bf16.gmra.mxu0 %v166
    %v200 = vpop.f32.mrf.mxu0
    %v201 = vadd.f32 %v147, %v200
    %v202 = vpop.f32.mrf.mxu0
    %v203 = vadd.f32 %v147, %v202
    %204 = vmatmul.bf16.gmra.mxu0 %v169
    %v205 = vpop.f32.mrf.mxu0
    %v206 = vadd.f32 %v147, %v205
    %v207 = vpop.f32.mrf.mxu0
    %v208 = vadd.f32 %v147, %v207
    %209 = vmatmul.bf16.gmra.mxu0 %v172
    %v210 = vpop.f32.mrf.mxu0
    %v211 = vadd.f32 %v147, %v210
    %v212 = vpop.f32.mrf.mxu0
    %v213 = vadd.f32 %v147, %v212
    %214 = vmatmul.bf16.gmra.mxu0 %v175
    %v215 = vpop.f32.mrf.mxu0
    %v216 = vadd.f32 %v147, %v215
    %v217 = vpop.f32.mrf.mxu0
    %v218 = vadd.f32 %v147, %v217
    %219 = vmatmul.bf16.gmra.mxu0 %v178
    %v220 = vpop.f32.mrf.mxu0
    %v221 = vadd.f32 %v147, %v220
    %v222 = vpop.f32.mrf.mxu0
    %v223 = vadd.f32 %v147, %v222
    %224 = vmatmul.bf16.gmra.mxu0 %v181
    %v225 = vpop.f32.mrf.mxu0
    %v226 = vadd.f32 %v147, %v225
    %v227 = vpop.f32.mrf.mxu0
    %v228 = vadd.f32 %v147, %v227
    %229 = vmatmul.bf16.gmra.mxu0 %v184
    %v230 = vpop.f32.mrf.mxu0
    %v231 = vadd.f32 %v147, %v230
    %v232 = vpop.f32.mrf.mxu0
    %v233 = vadd.f32 %v147, %v232
    %234 = vdwg.mxu0
    %235 = vmatpush.bf16.msra.mxu0 0
    %236 = vmatpush.bf16.msra.mxu0 0
    %237 = vmatpush.bf16.msra.mxu0 0
    %238 = vmatpush.bf16.msra.mxu0 0
    %239 = vmatpush.bf16.msra.mxu0 0
    %240 = vmatpush.bf16.msra.mxu0 0
    %241 = vmatpush.bf16.msra.mxu0 0
    %242 = vmatpush.bf16.msra.mxu0 %v158
    %243 = vmatmul.bf16.gmra.mxu0 %v163
    %v244 = vpop.f32.mrf.mxu0
    %v245 = vadd.f32 %v148, %v244
    %v246 = vpop.f32.mrf.mxu0
    %v247 = vadd.f32 %v148, %v246
    %248 = vmatmul.bf16.gmra.mxu0 %v166
    %v249 = vpop.f32.mrf.mxu0
    %v250 = vadd.f32 %v148, %v249
    %v251 = vpop.f32.mrf.mxu0
    %v252 = vadd.f32 %v148, %v251
    %253 = vmatmul.bf16.gmra.mxu0 %v169
    %v254 = vpop.f32.mrf.mxu0
    %v255 = vadd.f32 %v148, %v254
    %v256 = vpop.f32.mrf.mxu0
    %v257 = vadd.f32 %v148, %v256
    %258 = vmatmul.bf16.gmra.mxu0 %v172
    %v259 = vpop.f32.mrf.mxu0
    %v260 = vadd.f32 %v148, %v259
    %v261 = vpop.f32.mrf.mxu0
    %v262 = vadd.f32 %v148, %v261
    %263 = vmatmul.bf16.gmra.mxu0 %v175
    %v264 = vpop.f32.mrf.mxu0
    %v265 = vadd.f32 %v148, %v264
    %v266 = vpop.f32.mrf.mxu0
    %v267 = vadd.f32 %v148, %v266
    %268 = vmatmul.bf16.gmra.mxu0 %v178
    %v269 = vpop.f32.mrf.mxu0
    %v270 = vadd.f32 %v148, %v269
    %v271 = vpop.f32.mrf.mxu0
    %v272 = vadd.f32 %v148, %v271
    %273 = vmatmul.bf16.gmra.mxu0 %v181
    %v274 = vpop.f32.mrf.mxu0
    %v275 = vadd.f32 %v148, %v274
    %v276 = vpop.f32.mrf.mxu0
    %v277 = vadd.f32 %v148, %v276
    %278 = vmatmul.bf16.gmra.mxu0 %v184
    %v279 = vpop.f32.mrf.mxu0
    %v280 = vadd.f32 %v148, %v279
    %v281 = vpop.f32.mrf.mxu0
    %v282 = vadd.f32 %v148, %v281
    %283 = vdwg.mxu0
    %v284 = vmax.f32 %v196, 0.0
    %v285 = vmax.f32 %v245, 0.0
    %v286 = vmax.f32 %v198, 0.0
    %v287 = vmax.f32 %v247, 0.0
    %v288 = vmax.f32 %v201, 0.0
    %v289 = vmax.f32 %v250, 0.0
    %v290 = vmax.f32 %v203, 0.0
    %v291 = vmax.f32 %v252, 0.0
    %v292 = vmax.f32 %v206, 0.0
    %v293 = vmax.f32 %v255, 0.0
    %v294 = vmax.f32 %v208, 0.0
    %v295 = vmax.f32 %v257, 0.0
    %v296 = vmax.f32 %v211, 0.0
    %v297 = vmax.f32 %v260, 0.0
    %v298 = vmax.f32 %v213, 0.0
    %v299 = vmax.f32 %v262, 0.0
    %v300 = vmax.f32 %v216, 0.0
    %v301 = vmax.f32 %v265, 0.0
    %v302 = vmax.f32 %v218, 0.0
    %v303 = vmax.f32 %v267, 0.0
    %v304 = vmax.f32 %v221, 0.0
    %v305 = vmax.f32 %v270, 0.0
    %v306 = vmax.f32 %v223, 0.0
    %v307 = vmax.f32 %v272, 0.0
    %v308 = vmax.f32 %v226, 0.0
    %v309 = vmax.f32 %v275, 0.0
    %v310 = vmax.f32 %v228, 0.0
    %v311 = vmax.f32 %v277, 0.0
    %v312 = vmax.f32 %v231, 0.0
    %v313 = vmax.f32 %v280, 0.0
    %v314 = vmax.f32 %v233, 0.0
    %v315 = vmax.f32 %v282, 0.0
    %v316 = vpack.c.bf16 %v286, %v284
    %v317 = vpack.c.bf16 %v287, %v285
    %v318 = vpack.c.bf16 %v290, %v288
    %v319 = vpack.c.bf16 %v291, %v289
    %v320 = vpack.c.bf16 %v294, %v292
    %v321 = vpack.c.bf16 %v295, %v293
    %v322 = vpack.c.bf16 %v298, %v296
    %v323 = vpack.c.bf16 %v299, %v297
    %v324 = vpack.c.bf16 %v302, %v300
    %v325 = vpack.c.bf16 %v303, %v301
    %v326 = vpack.c.bf16 %v306, %v304
    %v327 = vpack.c.bf16 %v307, %v305
    %v328 = vpack.c.bf16 %v310, %v308
    %v329 = vpack.c.bf16 %v311, %v309
    %v330 = vpack.c.bf16 %v314, %v312
    %v331 = vpack.c.bf16 %v315, %v313
    %v332 = vld [vmem:[#allocation4] sm:$0xff]
    %v333 = vld [vmem:[#allocation4 + $0x8] sm:$0xff]
    %v334 = vld [vmem:[#allocation4 + $0x10] sm:$0xff]
    %v335 = vld [vmem:[#allocation4 + $0x18] sm:$0xff]
    %v336 = vld [vmem:[#allocation4 + $0x20] sm:$0xff]
    %v337 = vld [vmem:[#allocation4 + $0x28] sm:$0xff]
    %v338 = vld [vmem:[#allocation4 + $0x30] sm:$0xff]
    %v339 = vld [vmem:[#allocation4 + $0x38] sm:$0xff]
    %v340 = vld [vmem:[#allocation4 + $0x40] sm:$0xff]
    %v341 = vld [vmem:[#allocation4 + $0x48] sm:$0xff]
    %v342 = vld [vmem:[#allocation4 + $0x50] sm:$0xff]
    %v343 = vld [vmem:[#allocation4 + $0x58] sm:$0xff]
    %v344 = vld [vmem:[#allocation4 + $0x60] sm:$0xff]
    %v345 = vld [vmem:[#allocation4 + $0x68] sm:$0xff]
    %v346 = vld [vmem:[#allocation4 + $0x70] sm:$0xff]
    %v347 = vld [vmem:[#allocation4 + $0x78] sm:$0xff]
    %v348 = vld [vmem:[#allocation4 + $0x80] sm:$0xff]
    %v349 = vld [vmem:[#allocation4 + $0x88] sm:$0xff]
    %v350 = vld [vmem:[#allocation4 + $0x90] sm:$0xff]
    %v351 = vld [vmem:[#allocation4 + $0x98] sm:$0xff]
    %v352 = vld [vmem:[#allocation4 + $0xa0] sm:$0xff]
    %v353 = vld [vmem:[#allocation4 + $0xa8] sm:$0xff]
    %v354 = vld [vmem:[#allocation4 + $0xb0] sm:$0xff]
    %v355 = vld [vmem:[#allocation4 + $0xb8] sm:$0xff]
    %v356 = vld [vmem:[#allocation4 + $0xc0] sm:$0xff]
    %v357 = vld [vmem:[#allocation4 + $0xc8] sm:$0xff]
    %v358 = vld [vmem:[#allocation4 + $0xd0] sm:$0xff]
    %v359 = vld [vmem:[#allocation4 + $0xd8] sm:$0xff]
    %v360 = vld [vmem:[#allocation4 + $0xe0] sm:$0xff]
    %v361 = vld [vmem:[#allocation4 + $0xe8] sm:$0xff]
    %v362 = vld [vmem:[#allocation4 + $0xf0] sm:$0xff]
    %v363 = vld [vmem:[#allocation4 + $0xf8] sm:$0xff]
    %v364 = vld [vmem:[#allocation6] sm:$0x3]
    %v366 = vperm.slane %v364, 0
    %v367 = vperm.slane %v364, 1
    %v402 = vunpack.c.l.b16 %v332
    %v403 = vunpack.c.h.b16 %v332
    %v404 = vunpack.c.l.b16 %v333
    %v405 = vunpack.c.h.b16 %v333
    %v406 = vunpack.c.l.b16 %v334
    %v407 = vunpack.c.h.b16 %v334
    %v408 = vunpack.c.l.b16 %v335
    %v409 = vunpack.c.h.b16 %v335
    %v410 = vunpack.c.l.b16 %v336
    %v411 = vunpack.c.h.b16 %v336
    %v412 = vunpack.c.l.b16 %v337
    %v413 = vunpack.c.h.b16 %v337
    %v414 = vunpack.c.l.b16 %v338
    %v415 = vunpack.c.h.b16 %v338
    %v416 = vunpack.c.l.b16 %v339
    %v417 = vunpack.c.h.b16 %v339
    %v418 = vunpack.c.l.b16 %v340
    %v419 = vunpack.c.h.b16 %v340
    %v420 = vunpack.c.l.b16 %v341
    %v421 = vunpack.c.h.b16 %v341
    %v422 = vunpack.c.l.b16 %v342
    %v423 = vunpack.c.h.b16 %v342
    %v424 = vunpack.c.l.b16 %v343
    %v425 = vunpack.c.h.b16 %v343
    %v426 = vunpack.c.l.b16 %v344
    %v427 = vunpack.c.h.b16 %v344
    %v428 = vunpack.c.l.b16 %v345
    %v429 = vunpack.c.h.b16 %v345
    %v430 = vunpack.c.l.b16 %v346
    %v431 = vunpack.c.h.b16 %v346
    %v432 = vunpack.c.l.b16 %v347
    %v433 = vunpack.c.h.b16 %v347
    %v434 = vunpack.c.l.b16 %v348
    %v435 = vunpack.c.h.b16 %v348
    %v436 = vunpack.c.l.b16 %v349
    %v437 = vunpack.c.h.b16 %v349
    %v438 = vunpack.c.l.b16 %v350
    %v439 = vunpack.c.h.b16 %v350
    %v440 = vunpack.c.l.b16 %v351
    %v441 = vunpack.c.h.b16 %v351
    %v442 = vunpack.c.l.b16 %v352
    %v443 = vunpack.c.h.b16 %v352
    %v444 = vunpack.c.l.b16 %v353
    %v445 = vunpack.c.h.b16 %v353
    %v446 = vunpack.c.l.b16 %v354
    %v447 = vunpack.c.h.b16 %v354
    %v448 = vunpack.c.l.b16 %v355
    %v449 = vunpack.c.h.b16 %v355
    %v450 = vunpack.c.l.b16 %v356
    %v451 = vunpack.c.h.b16 %v356
    %v452 = vunpack.c.l.b16 %v357
    %v453 = vunpack.c.h.b16 %v357
    %v454 = vunpack.c.l.b16 %v358
    %v455 = vunpack.c.h.b16 %v358
    %v456 = vunpack.c.l.b16 %v359
    %v457 = vunpack.c.h.b16 %v359
    %v458 = vunpack.c.l.b16 %v360
    %v459 = vunpack.c.h.b16 %v360
    %v460 = vunpack.c.l.b16 %v361
    %v461 = vunpack.c.h.b16 %v361
    %v462 = vunpack.c.l.b16 %v362
    %v463 = vunpack.c.h.b16 %v362
    %v464 = vunpack.c.l.b16 %v363
    %v465 = vunpack.c.h.b16 %v363
    %v466 = vpack.c.b16 %v404, %v402
    %v467 = vpack.c.b16 %v405, %v403
    %v468 = vpack.c.b16 %v408, %v406
    %v469 = vpack.c.b16 %v409, %v407
    %v470 = vpack.c.b16 %v412, %v410
    %v471 = vpack.c.b16 %v413, %v411
    %v472 = vpack.c.b16 %v416, %v414
    %v473 = vpack.c.b16 %v417, %v415
    %v474 = vpack.c.b16 %v420, %v418
    %v475 = vpack.c.b16 %v421, %v419
    %v476 = vpack.c.b16 %v424, %v422
    %v477 = vpack.c.b16 %v425, %v423
    %v478 = vpack.c.b16 %v428, %v426
    %v479 = vpack.c.b16 %v429, %v427
    %v480 = vpack.c.b16 %v432, %v430
    %v481 = vpack.c.b16 %v433, %v431
    %v482 = vpack.c.b16 %v436, %v434
    %v483 = vpack.c.b16 %v437, %v435
    %v484 = vpack.c.b16 %v440, %v438
    %v485 = vpack.c.b16 %v441, %v439
    %v486 = vpack.c.b16 %v444, %v442
    %v487 = vpack.c.b16 %v445, %v443
    %v488 = vpack.c.b16 %v448, %v446
    %v489 = vpack.c.b16 %v449, %v447
    %v490 = vpack.c.b16 %v452, %v450
    %v491 = vpack.c.b16 %v453, %v451
    %v492 = vpack.c.b16 %v456, %v454
    %v493 = vpack.c.b16 %v457, %v455
    %v494 = vpack.c.b16 %v460, %v458
    %v495 = vpack.c.b16 %v461, %v459
    %v496 = vpack.c.b16 %v464, %v462
    %v497 = vpack.c.b16 %v465, %v463
    %530 = vmatpush.bf16.msra.mxu0 %v480
    %531 = vmatpush.bf16.msra.mxu0 %v478
    %532 = vmatpush.bf16.msra.mxu0 %v476
    %533 = vmatpush.bf16.msra.mxu0 %v474
    %534 = vmatpush.bf16.msra.mxu0 %v472
    %535 = vmatpush.bf16.msra.mxu0 %v470
    %536 = vmatpush.bf16.msra.mxu0 %v468
    %537 = vmatpush.bf16.msra.mxu0 %v466
    %538 = vmatmul.bf16.gmra.mxu0 %v316
    %v539 = vpop.f32.mrf.mxu0
    %v540 = vadd.f32 %v366, %v539
    %v541 = vpop.f32.mrf.mxu0
    %v542 = vadd.f32 %v366, %v541
    %543 = vmatmul.bf16.gmra.mxu0 %v318
    %v544 = vpop.f32.mrf.mxu0
    %v545 = vadd.f32 %v366, %v544
    %v546 = vpop.f32.mrf.mxu0
    %v547 = vadd.f32 %v366, %v546
    %548 = vmatmul.bf16.gmra.mxu0 %v320
    %v549 = vpop.f32.mrf.mxu0
    %v550 = vadd.f32 %v366, %v549
    %v551 = vpop.f32.mrf.mxu0
    %v552 = vadd.f32 %v366, %v551
    %553 = vmatmul.bf16.gmra.mxu0 %v322
    %v554 = vpop.f32.mrf.mxu0
    %v555 = vadd.f32 %v366, %v554
    %v556 = vpop.f32.mrf.mxu0
    %v557 = vadd.f32 %v366, %v556
    %558 = vmatmul.bf16.gmra.mxu0 %v324
    %v559 = vpop.f32.mrf.mxu0
    %v560 = vadd.f32 %v366, %v559
    %v561 = vpop.f32.mrf.mxu0
    %v562 = vadd.f32 %v366, %v561
    %563 = vmatmul.bf16.gmra.mxu0 %v326
    %v564 = vpop.f32.mrf.mxu0
    %v565 = vadd.f32 %v366, %v564
    %v566 = vpop.f32.mrf.mxu0
    %v567 = vadd.f32 %v366, %v566
    %568 = vmatmul.bf16.gmra.mxu0 %v328
    %v569 = vpop.f32.mrf.mxu0
    %v570 = vadd.f32 %v366, %v569
    %v571 = vpop.f32.mrf.mxu0
    %v572 = vadd.f32 %v366, %v571
    %573 = vmatmul.bf16.gmra.mxu0 %v330
    %v574 = vpop.f32.mrf.mxu0
    %v575 = vadd.f32 %v366, %v574
    %v576 = vpop.f32.mrf.mxu0
    %v577 = vadd.f32 %v366, %v576
    %578 = vdwg.mxu0
    %579 = vmatpush.bf16.msra.mxu0 %v496
    %580 = vmatpush.bf16.msra.mxu0 %v494
    %581 = vmatpush.bf16.msra.mxu0 %v492
    %582 = vmatpush.bf16.msra.mxu0 %v490
    %583 = vmatpush.bf16.msra.mxu0 %v488
    %584 = vmatpush.bf16.msra.mxu0 %v486
    %585 = vmatpush.bf16.msra.mxu0 %v484
    %586 = vmatpush.bf16.msra.mxu0 %v482
    %587 = vmatmul.bf16.gmra.mxu0 %v317
    %v588 = vpop.f32.mrf.mxu0
    %v589 = vadd.f32 %v540, %v588
    %v590 = vpop.f32.mrf.mxu0
    %v591 = vadd.f32 %v542, %v590
    %592 = vmatmul.bf16.gmra.mxu0 %v319
    %v593 = vpop.f32.mrf.mxu0
    %v594 = vadd.f32 %v545, %v593
    %v595 = vpop.f32.mrf.mxu0
    %v596 = vadd.f32 %v547, %v595
    %597 = vmatmul.bf16.gmra.mxu0 %v321
    %v598 = vpop.f32.mrf.mxu0
    %v599 = vadd.f32 %v550, %v598
    %v600 = vpop.f32.mrf.mxu0
    %v601 = vadd.f32 %v552, %v600
    %602 = vmatmul.bf16.gmra.mxu0 %v323
    %v603 = vpop.f32.mrf.mxu0
    %v604 = vadd.f32 %v555, %v603
    %v605 = vpop.f32.mrf.mxu0
    %v606 = vadd.f32 %v557, %v605
    %607 = vmatmul.bf16.gmra.mxu0 %v325
    %v608 = vpop.f32.mrf.mxu0
    %v609 = vadd.f32 %v560, %v608
    %v610 = vpop.f32.mrf.mxu0
    %v611 = vadd.f32 %v562, %v610
    %612 = vmatmul.bf16.gmra.mxu0 %v327
    %v613 = vpop.f32.mrf.mxu0
    %v614 = vadd.f32 %v565, %v613
    %v615 = vpop.f32.mrf.mxu0
    %v616 = vadd.f32 %v567, %v615
    %617 = vmatmul.bf16.gmra.mxu0 %v329
    %v618 = vpop.f32.mrf.mxu0
    %v619 = vadd.f32 %v570, %v618
    %v620 = vpop.f32.mrf.mxu0
    %v621 = vadd.f32 %v572, %v620
    %622 = vmatmul.bf16.gmra.mxu0 %v331
    %v623 = vpop.f32.mrf.mxu0
    %v624 = vadd.f32 %v575, %v623
    %v625 = vpop.f32.mrf.mxu0
    %v626 = vadd.f32 %v577, %v625
    %627 = vdwg.mxu0
    %628 = vmatpush.bf16.msra.mxu0 %v481
    %629 = vmatpush.bf16.msra.mxu0 %v479
    %630 = vmatpush.bf16.msra.mxu0 %v477
    %631 = vmatpush.bf16.msra.mxu0 %v475
    %632 = vmatpush.bf16.msra.mxu0 %v473
    %633 = vmatpush.bf16.msra.mxu0 %v471
    %634 = vmatpush.bf16.msra.mxu0 %v469
    %635 = vmatpush.bf16.msra.mxu0 %v467
    %636 = vmatmul.bf16.gmra.mxu0 %v316
    %v637 = vpop.f32.mrf.mxu0
    %v638 = vadd.f32 %v367, %v637
    %v639 = vpop.f32.mrf.mxu0
    %v640 = vadd.f32 %v367, %v639
    %641 = vmatmul.bf16.gmra.mxu0 %v318
    %v642 = vpop.f32.mrf.mxu0
    %v643 = vadd.f32 %v367, %v642
    %v644 = vpop.f32.mrf.mxu0
    %v645 = vadd.f32 %v367, %v644
    %646 = vmatmul.bf16.gmra.mxu0 %v320
    %v647 = vpop.f32.mrf.mxu0
    %v648 = vadd.f32 %v367, %v647
    %v649 = vpop.f32.mrf.mxu0
    %v650 = vadd.f32 %v367, %v649
    %651 = vmatmul.bf16.gmra.mxu0 %v322
    %v652 = vpop.f32.mrf.mxu0
    %v653 = vadd.f32 %v367, %v652
    %v654 = vpop.f32.mrf.mxu0
    %v655 = vadd.f32 %v367, %v654
    %656 = vmatmul.bf16.gmra.mxu0 %v324
    %v657 = vpop.f32.mrf.mxu0
    %v658 = vadd.f32 %v367, %v657
    %v659 = vpop.f32.mrf.mxu0
    %v660 = vadd.f32 %v367, %v659
    %661 = vmatmul.bf16.gmra.mxu0 %v326
    %v662 = vpop.f32.mrf.mxu0
    %v663 = vadd.f32 %v367, %v662
    %v664 = vpop.f32.mrf.mxu0
    %v665 = vadd.f32 %v367, %v664
    %666 = vmatmul.bf16.gmra.mxu0 %v328
    %v667 = vpop.f32.mrf.mxu0
    %v668 = vadd.f32 %v367, %v667
    %v669 = vpop.f32.mrf.mxu0
    %v670 = vadd.f32 %v367, %v669
    %671 = vmatmul.bf16.gmra.mxu0 %v330
    %v672 = vpop.f32.mrf.mxu0
    %v673 = vadd.f32 %v367, %v672
    %v674 = vpop.f32.mrf.mxu0
    %v675 = vadd.f32 %v367, %v674
    %676 = vdwg.mxu0
    %677 = vmatpush.bf16.msra.mxu0 %v497
    %678 = vmatpush.bf16.msra.mxu0 %v495
    %679 = vmatpush.bf16.msra.mxu0 %v493
    %680 = vmatpush.bf16.msra.mxu0 %v491
    %681 = vmatpush.bf16.msra.mxu0 %v489
    %682 = vmatpush.bf16.msra.mxu0 %v487
    %683 = vmatpush.bf16.msra.mxu0 %v485
    %684 = vmatpush.bf16.msra.mxu0 %v483
    %685 = vmatmul.bf16.gmra.mxu0 %v317
    %v686 = vpop.f32.mrf.mxu0
    %v687 = vadd.f32 %v638, %v686
    %v688 = vpop.f32.mrf.mxu0
    %v689 = vadd.f32 %v640, %v688
    %690 = vmatmul.bf16.gmra.mxu0 %v319
    %v691 = vpop.f32.mrf.mxu0
    %v692 = vadd.f32 %v643, %v691
    %v693 = vpop.f32.mrf.mxu0
    %v694 = vadd.f32 %v645, %v693
    %695 = vmatmul.bf16.gmra.mxu0 %v321
    %v696 = vpop.f32.mrf.mxu0
    %v697 = vadd.f32 %v648, %v696
    %v698 = vpop.f32.mrf.mxu0
    %v699 = vadd.f32 %v650, %v698
    %700 = vmatmul.bf16.gmra.mxu0 %v323
    %v701 = vpop.f32.mrf.mxu0
    %v702 = vadd.f32 %v653, %v701
    %v703 = vpop.f32.mrf.mxu0
    %v704 = vadd.f32 %v655, %v703
    %705 = vmatmul.bf16.gmra.mxu0 %v325
    %v706 = vpop.f32.mrf.mxu0
    %v707 = vadd.f32 %v658, %v706
    %v708 = vpop.f32.mrf.mxu0
    %v709 = vadd.f32 %v660, %v708
    %710 = vmatmul.bf16.gmra.mxu0 %v327
    %v711 = vpop.f32.mrf.mxu0
    %v712 = vadd.f32 %v663, %v711
    %v713 = vpop.f32.mrf.mxu0
    %v714 = vadd.f32 %v665, %v713
    %715 = vmatmul.bf16.gmra.mxu0 %v329
    %v716 = vpop.f32.mrf.mxu0
    %v717 = vadd.f32 %v668, %v716
    %v718 = vpop.f32.mrf.mxu0
    %v719 = vadd.f32 %v670, %v718
    %720 = vmatmul.bf16.gmra.mxu0 %v331
    %v721 = vpop.f32.mrf.mxu0
    %v722 = vadd.f32 %v673, %v721
    %v723 = vpop.f32.mrf.mxu0
    %v724 = vadd.f32 %v675, %v723
    %725 = vdwg.mxu0
    %v726 = vmax.f32 %v589, 0.0
    %v727 = vmax.f32 %v687, 0.0
    %v728 = vmax.f32 %v591, 0.0
    %v729 = vmax.f32 %v689, 0.0
    %v730 = vmax.f32 %v594, 0.0
    %v731 = vmax.f32 %v692, 0.0
    %v732 = vmax.f32 %v596, 0.0
    %v733 = vmax.f32 %v694, 0.0
    %v734 = vmax.f32 %v599, 0.0
    %v735 = vmax.f32 %v697, 0.0
    %v736 = vmax.f32 %v601, 0.0
    %v737 = vmax.f32 %v699, 0.0
    %v738 = vmax.f32 %v604, 0.0
    %v739 = vmax.f32 %v702, 0.0
    %v740 = vmax.f32 %v606, 0.0
    %v741 = vmax.f32 %v704, 0.0
    %v742 = vmax.f32 %v609, 0.0
    %v743 = vmax.f32 %v707, 0.0
    %v744 = vmax.f32 %v611, 0.0
    %v745 = vmax.f32 %v709, 0.0
    %v746 = vmax.f32 %v614, 0.0
    %v747 = vmax.f32 %v712, 0.0
    %v748 = vmax.f32 %v616, 0.0
    %v749 = vmax.f32 %v714, 0.0
    %v750 = vmax.f32 %v619, 0.0
    %v751 = vmax.f32 %v717, 0.0
    %v752 = vmax.f32 %v621, 0.0
    %v753 = vmax.f32 %v719, 0.0
    %v754 = vmax.f32 %v624, 0.0
    %v755 = vmax.f32 %v722, 0.0
    %v756 = vmax.f32 %v626, 0.0
    %v757 = vmax.f32 %v724, 0.0
    %v758 = vpack.c.bf16 %v728, %v726
    %v759 = vpack.c.bf16 %v729, %v727
    %v760 = vpack.c.bf16 %v732, %v730
    %v761 = vpack.c.bf16 %v733, %v731
    %v762 = vpack.c.bf16 %v736, %v734
    %v763 = vpack.c.bf16 %v737, %v735
    %v764 = vpack.c.bf16 %v740, %v738
    %v765 = vpack.c.bf16 %v741, %v739
    %v766 = vpack.c.bf16 %v744, %v742
    %v767 = vpack.c.bf16 %v745, %v743
    %v768 = vpack.c.bf16 %v748, %v746
    %v769 = vpack.c.bf16 %v749, %v747
    %v770 = vpack.c.bf16 %v752, %v750
    %v771 = vpack.c.bf16 %v753, %v751
    %v772 = vpack.c.bf16 %v756, %v754
    %v773 = vpack.c.bf16 %v757, %v755
    %v774 = vld [vmem:[#allocation7] sm:$0xff]
    %v775 = vld [vmem:[#allocation7 + $0x8] sm:$0xff]
    %v776 = vld [vmem:[#allocation7 + $0x10] sm:$0xff]
    %v777 = vld [vmem:[#allocation7 + $0x18] sm:$0xff]
    %v778 = vld [vmem:[#allocation7 + $0x20] sm:$0xff]
    %v779 = vld [vmem:[#allocation7 + $0x28] sm:$0xff]
    %v780 = vld [vmem:[#allocation7 + $0x30] sm:$0xff]
    %v781 = vld [vmem:[#allocation7 + $0x38] sm:$0xff]
    %v782 = vld [vmem:[#allocation7 + $0x40] sm:$0xff]
    %v783 = vld [vmem:[#allocation7 + $0x48] sm:$0xff]
    %v784 = vld [vmem:[#allocation7 + $0x50] sm:$0xff]
    %v785 = vld [vmem:[#allocation7 + $0x58] sm:$0xff]
    %v786 = vld [vmem:[#allocation7 + $0x60] sm:$0xff]
    %v787 = vld [vmem:[#allocation7 + $0x68] sm:$0xff]
    %v788 = vld [vmem:[#allocation7 + $0x70] sm:$0xff]
    %v789 = vld [vmem:[#allocation7 + $0x78] sm:$0xff]
    %v790 = vld [vmem:[#allocation7 + $0x80] sm:$0xff]
    %v791 = vld [vmem:[#allocation7 + $0x88] sm:$0xff]
    %v792 = vld [vmem:[#allocation7 + $0x90] sm:$0xff]
    %v793 = vld [vmem:[#allocation7 + $0x98] sm:$0xff]
    %v794 = vld [vmem:[#allocation7 + $0xa0] sm:$0xff]
    %v795 = vld [vmem:[#allocation7 + $0xa8] sm:$0xff]
    %v796 = vld [vmem:[#allocation7 + $0xb0] sm:$0xff]
    %v797 = vld [vmem:[#allocation7 + $0xb8] sm:$0xff]
    %v798 = vld [vmem:[#allocation7 + $0xc0] sm:$0xff]
    %v799 = vld [vmem:[#allocation7 + $0xc8] sm:$0xff]
    %v800 = vld [vmem:[#allocation7 + $0xd0] sm:$0xff]
    %v801 = vld [vmem:[#allocation7 + $0xd8] sm:$0xff]
    %v802 = vld [vmem:[#allocation7 + $0xe0] sm:$0xff]
    %v803 = vld [vmem:[#allocation7 + $0xe8] sm:$0xff]
    %v804 = vld [vmem:[#allocation7 + $0xf0] sm:$0xff]
    %v805 = vld [vmem:[#allocation7 + $0xf8] sm:$0xff]
    %v806 = vld [vmem:[#allocation9] sm:$0x3]
    %v808 = vperm.slane %v806, 0
    %v809 = vperm.slane %v806, 1
    %v844 = vunpack.c.l.b16 %v774
    %v845 = vunpack.c.h.b16 %v774
    %v846 = vunpack.c.l.b16 %v775
    %v847 = vunpack.c.h.b16 %v775
    %v848 = vunpack.c.l.b16 %v776
    %v849 = vunpack.c.h.b16 %v776
    %v850 = vunpack.c.l.b16 %v777
    %v851 = vunpack.c.h.b16 %v777
    %v852 = vunpack.c.l.b16 %v778
    %v853 = vunpack.c.h.b16 %v778
    %v854 = vunpack.c.l.b16 %v779
    %v855 = vunpack.c.h.b16 %v779
    %v856 = vunpack.c.l.b16 %v780
    %v857 = vunpack.c.h.b16 %v780
    %v858 = vunpack.c.l.b16 %v781
    %v859 = vunpack.c.h.b16 %v781
    %v860 = vunpack.c.l.b16 %v782
    %v861 = vunpack.c.h.b16 %v782
    %v862 = vunpack.c.l.b16 %v783
    %v863 = vunpack.c.h.b16 %v783
    %v864 = vunpack.c.l.b16 %v784
    %v865 = vunpack.c.h.b16 %v784
    %v866 = vunpack.c.l.b16 %v785
    %v867 = vunpack.c.h.b16 %v785
    %v868 = vunpack.c.l.b16 %v786
    %v869 = vunpack.c.h.b16 %v786
    %v870 = vunpack.c.l.b16 %v787
    %v871 = vunpack.c.h.b16 %v787
    %v872 = vunpack.c.l.b16 %v788
    %v873 = vunpack.c.h.b16 %v788
    %v874 = vunpack.c.l.b16 %v789
    %v875 = vunpack.c.h.b16 %v789
    %v876 = vunpack.c.l.b16 %v790
    %v877 = vunpack.c.h.b16 %v790
    %v878 = vunpack.c.l.b16 %v791
    %v879 = vunpack.c.h.b16 %v791
    %v880 = vunpack.c.l.b16 %v792
    %v881 = vunpack.c.h.b16 %v792
    %v882 = vunpack.c.l.b16 %v793
    %v883 = vunpack.c.h.b16 %v793
    %v884 = vunpack.c.l.b16 %v794
    %v885 = vunpack.c.h.b16 %v794
    %v886 = vunpack.c.l.b16 %v795
    %v887 = vunpack.c.h.b16 %v795
    %v888 = vunpack.c.l.b16 %v796
    %v889 = vunpack.c.h.b16 %v796
    %v890 = vunpack.c.l.b16 %v797
    %v891 = vunpack.c.h.b16 %v797
    %v892 = vunpack.c.l.b16 %v798
    %v893 = vunpack.c.h.b16 %v798
    %v894 = vunpack.c.l.b16 %v799
    %v895 = vunpack.c.h.b16 %v799
    %v896 = vunpack.c.l.b16 %v800
    %v897 = vunpack.c.h.b16 %v800
    %v898 = vunpack.c.l.b16 %v801
    %v899 = vunpack.c.h.b16 %v801
    %v900 = vunpack.c.l.b16 %v802
    %v901 = vunpack.c.h.b16 %v802
    %v902 = vunpack.c.l.b16 %v803
    %v903 = vunpack.c.h.b16 %v803
    %v904 = vunpack.c.l.b16 %v804
    %v905 = vunpack.c.h.b16 %v804
    %v906 = vunpack.c.l.b16 %v805
    %v907 = vunpack.c.h.b16 %v805
    %v908 = vpack.c.b16 %v846, %v844
    %v909 = vpack.c.b16 %v847, %v845
    %v910 = vpack.c.b16 %v850, %v848
    %v911 = vpack.c.b16 %v851, %v849
    %v912 = vpack.c.b16 %v854, %v852
    %v913 = vpack.c.b16 %v855, %v853
    %v914 = vpack.c.b16 %v858, %v856
    %v915 = vpack.c.b16 %v859, %v857
    %v916 = vpack.c.b16 %v862, %v860
    %v917 = vpack.c.b16 %v863, %v861
    %v918 = vpack.c.b16 %v866, %v864
    %v919 = vpack.c.b16 %v867, %v865
    %v920 = vpack.c.b16 %v870, %v868
    %v921 = vpack.c.b16 %v871, %v869
    %v922 = vpack.c.b16 %v874, %v872
    %v923 = vpack.c.b16 %v875, %v873
    %v924 = vpack.c.b16 %v878, %v876
    %v925 = vpack.c.b16 %v879, %v877
    %v926 = vpack.c.b16 %v882, %v880
    %v927 = vpack.c.b16 %v883, %v881
    %v928 = vpack.c.b16 %v886, %v884
    %v929 = vpack.c.b16 %v887, %v885
    %v930 = vpack.c.b16 %v890, %v888
    %v931 = vpack.c.b16 %v891, %v889
    %v932 = vpack.c.b16 %v894, %v892
    %v933 = vpack.c.b16 %v895, %v893
    %v934 = vpack.c.b16 %v898, %v896
    %v935 = vpack.c.b16 %v899, %v897
    %v936 = vpack.c.b16 %v902, %v900
    %v937 = vpack.c.b16 %v903, %v901
    %v938 = vpack.c.b16 %v906, %v904
    %v939 = vpack.c.b16 %v907, %v905
    %972 = vmatpush.bf16.msra.mxu0 %v922
    %973 = vmatpush.bf16.msra.mxu0 %v920
    %974 = vmatpush.bf16.msra.mxu0 %v918
    %975 = vmatpush.bf16.msra.mxu0 %v916
    %976 = vmatpush.bf16.msra.mxu0 %v914
    %977 = vmatpush.bf16.msra.mxu0 %v912
    %978 = vmatpush.bf16.msra.mxu0 %v910
    %979 = vmatpush.bf16.msra.mxu0 %v908
    %980 = vmatmul.bf16.gmra.mxu0 %v758
    %v981 = vpop.f32.mrf.mxu0
    %v982 = vadd.f32 %v808, %v981
    %v983 = vpop.f32.mrf.mxu0
    %v984 = vadd.f32 %v808, %v983
    %985 = vmatmul.bf16.gmra.mxu0 %v760
    %v986 = vpop.f32.mrf.mxu0
    %v987 = vadd.f32 %v808, %v986
    %v988 = vpop.f32.mrf.mxu0
    %v989 = vadd.f32 %v808, %v988
    %990 = vmatmul.bf16.gmra.mxu0 %v762
    %v991 = vpop.f32.mrf.mxu0
    %v992 = vadd.f32 %v808, %v991
    %v993 = vpop.f32.mrf.mxu0
    %v994 = vadd.f32 %v808, %v993
    %995 = vmatmul.bf16.gmra.mxu0 %v764
    %v996 = vpop.f32.mrf.mxu0
    %v997 = vadd.f32 %v808, %v996
    %v998 = vpop.f32.mrf.mxu0
    %v999 = vadd.f32 %v808, %v998
    %1000 = vmatmul.bf16.gmra.mxu0 %v766
    %v1001 = vpop.f32.mrf.mxu0
    %v1002 = vadd.f32 %v808, %v1001
    %v1003 = vpop.f32.mrf.mxu0
    %v1004 = vadd.f32 %v808, %v1003
    %1005 = vmatmul.bf16.gmra.mxu0 %v768
    %v1006 = vpop.f32.mrf.mxu0
    %v1007 = vadd.f32 %v808, %v1006
    %v1008 = vpop.f32.mrf.mxu0
    %v1009 = vadd.f32 %v808, %v1008
    %1010 = vmatmul.bf16.gmra.mxu0 %v770
    %v1011 = vpop.f32.mrf.mxu0
    %v1012 = vadd.f32 %v808, %v1011
    %v1013 = vpop.f32.mrf.mxu0
    %v1014 = vadd.f32 %v808, %v1013
    %1015 = vmatmul.bf16.gmra.mxu0 %v772
    %v1016 = vpop.f32.mrf.mxu0
    %v1017 = vadd.f32 %v808, %v1016
    %v1018 = vpop.f32.mrf.mxu0
    %v1019 = vadd.f32 %v808, %v1018
    %1020 = vdwg.mxu0
    %1021 = vmatpush.bf16.msra.mxu0 %v938
    %1022 = vmatpush.bf16.msra.mxu0 %v936
    %1023 = vmatpush.bf16.msra.mxu0 %v934
    %1024 = vmatpush.bf16.msra.mxu0 %v932
    %1025 = vmatpush.bf16.msra.mxu0 %v930
    %1026 = vmatpush.bf16.msra.mxu0 %v928
    %1027 = vmatpush.bf16.msra.mxu0 %v926
    %1028 = vmatpush.bf16.msra.mxu0 %v924
    %1029 = vmatmul.bf16.gmra.mxu0 %v759
    %v1030 = vpop.f32.mrf.mxu0
    %v1031 = vadd.f32 %v982, %v1030
    %v1032 = vpop.f32.mrf.mxu0
    %v1033 = vadd.f32 %v984, %v1032
    %1034 = vmatmul.bf16.gmra.mxu0 %v761
    %v1035 = vpop.f32.mrf.mxu0
    %v1036 = vadd.f32 %v987, %v1035
    %v1037 = vpop.f32.mrf.mxu0
    %v1038 = vadd.f32 %v989, %v1037
    %1039 = vmatmul.bf16.gmra.mxu0 %v763
    %v1040 = vpop.f32.mrf.mxu0
    %v1041 = vadd.f32 %v992, %v1040
    %v1042 = vpop.f32.mrf.mxu0
    %v1043 = vadd.f32 %v994, %v1042
    %1044 = vmatmul.bf16.gmra.mxu0 %v765
    %v1045 = vpop.f32.mrf.mxu0
    %v1046 = vadd.f32 %v997, %v1045
    %v1047 = vpop.f32.mrf.mxu0
    %v1048 = vadd.f32 %v999, %v1047
    %1049 = vmatmul.bf16.gmra.mxu0 %v767
    %v1050 = vpop.f32.mrf.mxu0
    %v1051 = vadd.f32 %v1002, %v1050
    %v1052 = vpop.f32.mrf.mxu0
    %v1053 = vadd.f32 %v1004, %v1052
    %1054 = vmatmul.bf16.gmra.mxu0 %v769
    %v1055 = vpop.f32.mrf.mxu0
    %v1056 = vadd.f32 %v1007, %v1055
    %v1057 = vpop.f32.mrf.mxu0
    %v1058 = vadd.f32 %v1009, %v1057
    %1059 = vmatmul.bf16.gmra.mxu0 %v771
    %v1060 = vpop.f32.mrf.mxu0
    %v1061 = vadd.f32 %v1012, %v1060
    %v1062 = vpop.f32.mrf.mxu0
    %v1063 = vadd.f32 %v1014, %v1062
    %1064 = vmatmul.bf16.gmra.mxu0 %v773
    %v1065 = vpop.f32.mrf.mxu0
    %v1066 = vadd.f32 %v1017, %v1065
    %v1067 = vpop.f32.mrf.mxu0
    %v1068 = vadd.f32 %v1019, %v1067
    %1069 = vdwg.mxu0
    %1070 = vmatpush.bf16.msra.mxu0 %v923
    %1071 = vmatpush.bf16.msra.mxu0 %v921
    %1072 = vmatpush.bf16.msra.mxu0 %v919
    %1073 = vmatpush.bf16.msra.mxu0 %v917
    %1074 = vmatpush.bf16.msra.mxu0 %v915
    %1075 = vmatpush.bf16.msra.mxu0 %v913
    %1076 = vmatpush.bf16.msra.mxu0 %v911
    %1077 = vmatpush.bf16.msra.mxu0 %v909
    %1078 = vmatmul.bf16.gmra.mxu0 %v758
    %v1079 = vpop.f32.mrf.mxu0
    %v1080 = vadd.f32 %v809, %v1079
    %v1081 = vpop.f32.mrf.mxu0
    %v1082 = vadd.f32 %v809, %v1081
    %1083 = vmatmul.bf16.gmra.mxu0 %v760
    %v1084 = vpop.f32.mrf.mxu0
    %v1085 = vadd.f32 %v809, %v1084
    %v1086 = vpop.f32.mrf.mxu0
    %v1087 = vadd.f32 %v809, %v1086
    %1088 = vmatmul.bf16.gmra.mxu0 %v762
    %v1089 = vpop.f32.mrf.mxu0
    %v1090 = vadd.f32 %v809, %v1089
    %v1091 = vpop.f32.mrf.mxu0
    %v1092 = vadd.f32 %v809, %v1091
    %1093 = vmatmul.bf16.gmra.mxu0 %v764
    %v1094 = vpop.f32.mrf.mxu0
    %v1095 = vadd.f32 %v809, %v1094
    %v1096 = vpop.f32.mrf.mxu0
    %v1097 = vadd.f32 %v809, %v1096
    %1098 = vmatmul.bf16.gmra.mxu0 %v766
    %v1099 = vpop.f32.mrf.mxu0
    %v1100 = vadd.f32 %v809, %v1099
    %v1101 = vpop.f32.mrf.mxu0
    %v1102 = vadd.f32 %v809, %v1101
    %1103 = vmatmul.bf16.gmra.mxu0 %v768
    %v1104 = vpop.f32.mrf.mxu0
    %v1105 = vadd.f32 %v809, %v1104
    %v1106 = vpop.f32.mrf.mxu0
    %v1107 = vadd.f32 %v809, %v1106
    %1108 = vmatmul.bf16.gmra.mxu0 %v770
    %v1109 = vpop.f32.mrf.mxu0
    %v1110 = vadd.f32 %v809, %v1109
    %v1111 = vpop.f32.mrf.mxu0
    %v1112 = vadd.f32 %v809, %v1111
    %1113 = vmatmul.bf16.gmra.mxu0 %v772
    %v1114 = vpop.f32.mrf.mxu0
    %v1115 = vadd.f32 %v809, %v1114
    %v1116 = vpop.f32.mrf.mxu0
    %v1117 = vadd.f32 %v809, %v1116
    %1118 = vdwg.mxu0
    %1119 = vmatpush.bf16.msra.mxu0 %v939
    %1120 = vmatpush.bf16.msra.mxu0 %v937
    %1121 = vmatpush.bf16.msra.mxu0 %v935
    %1122 = vmatpush.bf16.msra.mxu0 %v933
    %1123 = vmatpush.bf16.msra.mxu0 %v931
    %1124 = vmatpush.bf16.msra.mxu0 %v929
    %1125 = vmatpush.bf16.msra.mxu0 %v927
    %1126 = vmatpush.bf16.msra.mxu0 %v925
    %1127 = vmatmul.bf16.gmra.mxu0 %v759
    %v1128 = vpop.f32.mrf.mxu0
    %v1129 = vadd.f32 %v1080, %v1128
    %v1130 = vpop.f32.mrf.mxu0
    %v1131 = vadd.f32 %v1082, %v1130
    %1132 = vmatmul.bf16.gmra.mxu0 %v761
    %v1133 = vpop.f32.mrf.mxu0
    %v1134 = vadd.f32 %v1085, %v1133
    %v1135 = vpop.f32.mrf.mxu0
    %v1136 = vadd.f32 %v1087, %v1135
    %1137 = vmatmul.bf16.gmra.mxu0 %v763
    %v1138 = vpop.f32.mrf.mxu0
    %v1139 = vadd.f32 %v1090, %v1138
    %v1140 = vpop.f32.mrf.mxu0
    %v1141 = vadd.f32 %v1092, %v1140
    %1142 = vmatmul.bf16.gmra.mxu0 %v765
    %v1143 = vpop.f32.mrf.mxu0
    %v1144 = vadd.f32 %v1095, %v1143
    %v1145 = vpop.f32.mrf.mxu0
    %v1146 = vadd.f32 %v1097, %v1145
    %1147 = vmatmul.bf16.gmra.mxu0 %v767
    %v1148 = vpop.f32.mrf.mxu0
    %v1149 = vadd.f32 %v1100, %v1148
    %v1150 = vpop.f32.mrf.mxu0
    %v1151 = vadd.f32 %v1102, %v1150
    %1152 = vmatmul.bf16.gmra.mxu0 %v769
    %v1153 = vpop.f32.mrf.mxu0
    %v1154 = vadd.f32 %v1105, %v1153
    %v1155 = vpop.f32.mrf.mxu0
    %v1156 = vadd.f32 %v1107, %v1155
    %1157 = vmatmul.bf16.gmra.mxu0 %v771
    %v1158 = vpop.f32.mrf.mxu0
    %v1159 = vadd.f32 %v1110, %v1158
    %v1160 = vpop.f32.mrf.mxu0
    %v1161 = vadd.f32 %v1112, %v1160
    %1162 = vmatmul.bf16.gmra.mxu0 %v773
    %v1163 = vpop.f32.mrf.mxu0
    %v1164 = vadd.f32 %v1115, %v1163
    %v1165 = vpop.f32.mrf.mxu0
    %v1166 = vadd.f32 %v1117, %v1165
    %1167 = vdwg.mxu0
    %v1168 = vmax.f32 %v1031, 0.0
    %v1169 = vmax.f32 %v1129, 0.0
    %v1170 = vmax.f32 %v1033, 0.0
    %v1171 = vmax.f32 %v1131, 0.0
    %v1172 = vmax.f32 %v1036, 0.0
    %v1173 = vmax.f32 %v1134, 0.0
    %v1174 = vmax.f32 %v1038, 0.0
    %v1175 = vmax.f32 %v1136, 0.0
    %v1176 = vmax.f32 %v1041, 0.0
    %v1177 = vmax.f32 %v1139, 0.0
    %v1178 = vmax.f32 %v1043, 0.0
    %v1179 = vmax.f32 %v1141, 0.0
    %v1180 = vmax.f32 %v1046, 0.0
    %v1181 = vmax.f32 %v1144, 0.0
    %v1182 = vmax.f32 %v1048, 0.0
    %v1183 = vmax.f32 %v1146, 0.0
    %v1184 = vmax.f32 %v1051, 0.0
    %v1185 = vmax.f32 %v1149, 0.0
    %v1186 = vmax.f32 %v1053, 0.0
    %v1187 = vmax.f32 %v1151, 0.0
    %v1188 = vmax.f32 %v1056, 0.0
    %v1189 = vmax.f32 %v1154, 0.0
    %v1190 = vmax.f32 %v1058, 0.0
    %v1191 = vmax.f32 %v1156, 0.0
    %v1192 = vmax.f32 %v1061, 0.0
    %v1193 = vmax.f32 %v1159, 0.0
    %v1194 = vmax.f32 %v1063, 0.0
    %v1195 = vmax.f32 %v1161, 0.0
    %v1196 = vmax.f32 %v1066, 0.0
    %v1197 = vmax.f32 %v1164, 0.0
    %v1198 = vmax.f32 %v1068, 0.0
    %v1199 = vmax.f32 %v1166, 0.0
    %v1200 = vpack.c.bf16 %v1170, %v1168
    %v1201 = vpack.c.bf16 %v1171, %v1169
    %v1202 = vpack.c.bf16 %v1174, %v1172
    %v1203 = vpack.c.bf16 %v1175, %v1173
    %v1204 = vpack.c.bf16 %v1178, %v1176
    %v1205 = vpack.c.bf16 %v1179, %v1177
    %v1206 = vpack.c.bf16 %v1182, %v1180
    %v1207 = vpack.c.bf16 %v1183, %v1181
    %v1208 = vpack.c.bf16 %v1186, %v1184
    %v1209 = vpack.c.bf16 %v1187, %v1185
    %v1210 = vpack.c.bf16 %v1190, %v1188
    %v1211 = vpack.c.bf16 %v1191, %v1189
    %v1212 = vpack.c.bf16 %v1194, %v1192
    %v1213 = vpack.c.bf16 %v1195, %v1193
    %v1214 = vpack.c.bf16 %v1198, %v1196
    %v1215 = vpack.c.bf16 %v1199, %v1197
    %v1216 = vld [vmem:[%s7] sm:$0xf]
    %v1217 = vld [vmem:[%s7 + $0x4] sm:$0xf]
    %v1218 = vld [vmem:[%s7 + $0x8] sm:$0xf]
    %v1219 = vld [vmem:[%s7 + $0xc] sm:$0xf]
    %v1220 = vld [vmem:[%s7 + $0x10] sm:$0xf]
    %v1221 = vld [vmem:[%s7 + $0x14] sm:$0xf]
    %v1222 = vld [vmem:[%s7 + $0x18] sm:$0xf]
    %v1223 = vld [vmem:[%s7 + $0x1c] sm:$0xf]
    %v1224 = vld [vmem:[%s7 + $0x20] sm:$0xf]
    %v1225 = vld [vmem:[%s7 + $0x24] sm:$0xf]
    %v1226 = vld [vmem:[%s7 + $0x28] sm:$0xf]
    %v1227 = vld [vmem:[%s7 + $0x2c] sm:$0xf]
    %v1228 = vld [vmem:[%s7 + $0x30] sm:$0xf]
    %v1229 = vld [vmem:[%s7 + $0x34] sm:$0xf]
    %v1230 = vld [vmem:[%s7 + $0x38] sm:$0xf]
    %v1231 = vld [vmem:[%s7 + $0x3c] sm:$0xf]
    %v1232 = vld [vmem:[%s7 + $0x40] sm:$0xf]
    %v1233 = vld [vmem:[%s7 + $0x44] sm:$0xf]
    %v1234 = vld [vmem:[%s7 + $0x48] sm:$0xf]
    %v1235 = vld [vmem:[%s7 + $0x4c] sm:$0xf]
    %v1236 = vld [vmem:[%s7 + $0x50] sm:$0xf]
    %v1237 = vld [vmem:[%s7 + $0x54] sm:$0xf]
    %v1238 = vld [vmem:[%s7 + $0x58] sm:$0xf]
    %v1239 = vld [vmem:[%s7 + $0x5c] sm:$0xf]
    %v1240 = vld [vmem:[%s7 + $0x60] sm:$0xf]
    %v1241 = vld [vmem:[%s7 + $0x64] sm:$0xf]
    %v1242 = vld [vmem:[%s7 + $0x68] sm:$0xf]
    %v1243 = vld [vmem:[%s7 + $0x6c] sm:$0xf]
    %v1244 = vld [vmem:[%s7 + $0x70] sm:$0xf]
    %v1245 = vld [vmem:[%s7 + $0x74] sm:$0xf]
    %v1246 = vld [vmem:[%s7 + $0x78] sm:$0xf]
    %v1247 = vld [vmem:[%s7 + $0x7c] sm:$0xf]
    %v1248 = vld [vmem:[#allocation10] sm:$0x1]
    %v1250 = vperm.slane %v1248, 0
    %v1284 = vunpack.c.l.b16 %v1216
    %v1285 = vunpack.c.l.b16 %v1217
    %v1286 = vunpack.c.l.b16 %v1218
    %v1287 = vunpack.c.l.b16 %v1219
    %v1288 = vunpack.c.l.b16 %v1220
    %v1289 = vunpack.c.l.b16 %v1221
    %v1290 = vunpack.c.l.b16 %v1222
    %v1291 = vunpack.c.l.b16 %v1223
    %v1292 = vunpack.c.l.b16 %v1224
    %v1293 = vunpack.c.l.b16 %v1225
    %v1294 = vunpack.c.l.b16 %v1226
    %v1295 = vunpack.c.l.b16 %v1227
    %v1296 = vunpack.c.l.b16 %v1228
    %v1297 = vunpack.c.l.b16 %v1229
    %v1298 = vunpack.c.l.b16 %v1230
    %v1299 = vunpack.c.l.b16 %v1231
    %v1300 = vunpack.c.l.b16 %v1232
    %v1301 = vunpack.c.l.b16 %v1233
    %v1302 = vunpack.c.l.b16 %v1234
    %v1303 = vunpack.c.l.b16 %v1235
    %v1304 = vunpack.c.l.b16 %v1236
    %v1305 = vunpack.c.l.b16 %v1237
    %v1306 = vunpack.c.l.b16 %v1238
    %v1307 = vunpack.c.l.b16 %v1239
    %v1308 = vunpack.c.l.b16 %v1240
    %v1309 = vunpack.c.l.b16 %v1241
    %v1310 = vunpack.c.l.b16 %v1242
    %v1311 = vunpack.c.l.b16 %v1243
    %v1312 = vunpack.c.l.b16 %v1244
    %v1313 = vunpack.c.l.b16 %v1245
    %v1314 = vunpack.c.l.b16 %v1246
    %v1315 = vunpack.c.l.b16 %v1247
    %v1316 = vpack.c.b16 %v1285, %v1284
    %v1317 = vpack.c.b16 %v1287, %v1286
    %v1318 = vpack.c.b16 %v1289, %v1288
    %v1319 = vpack.c.b16 %v1291, %v1290
    %v1320 = vpack.c.b16 %v1293, %v1292
    %v1321 = vpack.c.b16 %v1295, %v1294
    %v1322 = vpack.c.b16 %v1297, %v1296
    %v1323 = vpack.c.b16 %v1299, %v1298
    %v1324 = vpack.c.b16 %v1301, %v1300
    %v1325 = vpack.c.b16 %v1303, %v1302
    %v1326 = vpack.c.b16 %v1305, %v1304
    %v1327 = vpack.c.b16 %v1307, %v1306
    %v1328 = vpack.c.b16 %v1309, %v1308
    %v1329 = vpack.c.b16 %v1311, %v1310
    %v1330 = vpack.c.b16 %v1313, %v1312
    %v1331 = vpack.c.b16 %v1315, %v1314
    %1348 = vmatpush.bf16.msra.mxu0 %v1323
    %1349 = vmatpush.bf16.msra.mxu0 %v1322
    %1350 = vmatpush.bf16.msra.mxu0 %v1321
    %1351 = vmatpush.bf16.msra.mxu0 %v1320
    %1352 = vmatpush.bf16.msra.mxu0 %v1319
    %1353 = vmatpush.bf16.msra.mxu0 %v1318
    %1354 = vmatpush.bf16.msra.mxu0 %v1317
    %1355 = vmatpush.bf16.msra.mxu0 %v1316
    %1356 = vmatmul.bf16.gmra.mxu0 %v1200
    %v1357 = vpop.f32.mrf.mxu0
    %v1358 = vadd.f32 %v1250, %v1357
    %v1359 = vpop.f32.mrf.mxu0
    %v1360 = vadd.f32 %v1250, %v1359
    %1361 = vmatmul.bf16.gmra.mxu0 %v1202
    %v1362 = vpop.f32.mrf.mxu0
    %v1363 = vadd.f32 %v1250, %v1362
    %v1364 = vpop.f32.mrf.mxu0
    %v1365 = vadd.f32 %v1250, %v1364
    %1366 = vmatmul.bf16.gmra.mxu0 %v1204
    %v1367 = vpop.f32.mrf.mxu0
    %v1368 = vadd.f32 %v1250, %v1367
    %v1369 = vpop.f32.mrf.mxu0
    %v1370 = vadd.f32 %v1250, %v1369
    %1371 = vmatmul.bf16.gmra.mxu0 %v1206
    %v1372 = vpop.f32.mrf.mxu0
    %v1373 = vadd.f32 %v1250, %v1372
    %v1374 = vpop.f32.mrf.mxu0
    %v1375 = vadd.f32 %v1250, %v1374
    %1376 = vmatmul.bf16.gmra.mxu0 %v1208
    %v1377 = vpop.f32.mrf.mxu0
    %v1378 = vadd.f32 %v1250, %v1377
    %v1379 = vpop.f32.mrf.mxu0
    %v1380 = vadd.f32 %v1250, %v1379
    %1381 = vmatmul.bf16.gmra.mxu0 %v1210
    %v1382 = vpop.f32.mrf.mxu0
    %v1383 = vadd.f32 %v1250, %v1382
    %v1384 = vpop.f32.mrf.mxu0
    %v1385 = vadd.f32 %v1250, %v1384
    %1386 = vmatmul.bf16.gmra.mxu0 %v1212
    %v1387 = vpop.f32.mrf.mxu0
    %v1388 = vadd.f32 %v1250, %v1387
    %v1389 = vpop.f32.mrf.mxu0
    %v1390 = vadd.f32 %v1250, %v1389
    %1391 = vmatmul.bf16.gmra.mxu0 %v1214
    %v1392 = vpop.f32.mrf.mxu0
    %v1393 = vadd.f32 %v1250, %v1392
    %v1394 = vpop.f32.mrf.mxu0
    %v1395 = vadd.f32 %v1250, %v1394
    %1396 = vdwg.mxu0
    %1397 = vmatpush.bf16.msra.mxu0 %v1331
    %1398 = vmatpush.bf16.msra.mxu0 %v1330
    %1399 = vmatpush.bf16.msra.mxu0 %v1329
    %1400 = vmatpush.bf16.msra.mxu0 %v1328
    %1401 = vmatpush.bf16.msra.mxu0 %v1327
    %1402 = vmatpush.bf16.msra.mxu0 %v1326
    %1403 = vmatpush.bf16.msra.mxu0 %v1325
    %1404 = vmatpush.bf16.msra.mxu0 %v1324
    %1405 = vmatmul.bf16.gmra.mxu0 %v1201
    %v1406 = vpop.f32.mrf.mxu0
    %v1407 = vadd.f32 %v1358, %v1406
    %v1408 = vpop.f32.mrf.mxu0
    %v1409 = vadd.f32 %v1360, %v1408
    %1410 = vmatmul.bf16.gmra.mxu0 %v1203
    %v1411 = vpop.f32.mrf.mxu0
    %v1412 = vadd.f32 %v1363, %v1411
    %v1413 = vpop.f32.mrf.mxu0
    %v1414 = vadd.f32 %v1365, %v1413
    %1415 = vmatmul.bf16.gmra.mxu0 %v1205
    %v1416 = vpop.f32.mrf.mxu0
    %v1417 = vadd.f32 %v1368, %v1416
    %v1418 = vpop.f32.mrf.mxu0
    %v1419 = vadd.f32 %v1370, %v1418
    %1420 = vmatmul.bf16.gmra.mxu0 %v1207
    %v1421 = vpop.f32.mrf.mxu0
    %v1422 = vadd.f32 %v1373, %v1421
    %v1423 = vpop.f32.mrf.mxu0
    %v1424 = vadd.f32 %v1375, %v1423
    %1425 = vmatmul.bf16.gmra.mxu0 %v1209
    %v1426 = vpop.f32.mrf.mxu0
    %v1427 = vadd.f32 %v1378, %v1426
    %v1428 = vpop.f32.mrf.mxu0
    %v1429 = vadd.f32 %v1380, %v1428
    %1430 = vmatmul.bf16.gmra.mxu0 %v1211
    %v1431 = vpop.f32.mrf.mxu0
    %v1432 = vadd.f32 %v1383, %v1431
    %v1433 = vpop.f32.mrf.mxu0
    %v1434 = vadd.f32 %v1385, %v1433
    %1435 = vmatmul.bf16.gmra.mxu0 %v1213
    %v1436 = vpop.f32.mrf.mxu0
    %v1437 = vadd.f32 %v1388, %v1436
    %v1438 = vpop.f32.mrf.mxu0
    %v1439 = vadd.f32 %v1390, %v1438
    %1440 = vmatmul.bf16.gmra.mxu0 %v1215
    %v1441 = vpop.f32.mrf.mxu0
    %v1442 = vadd.f32 %v1393, %v1441
    %v1443 = vpop.f32.mrf.mxu0
    %v1444 = vadd.f32 %v1395, %v1443
    %1445 = vdwg.mxu0
    %1446 = vst [vmem:[%s9] sm:$0xff] %v1407
    %1447 = vst [vmem:[%s9 + $0x8] sm:$0xff] %v1409
    %1448 = vst [vmem:[%s9 + $0x10] sm:$0xff] %v1412
    %1449 = vst [vmem:[%s9 + $0x18] sm:$0xff] %v1414
    %1450 = vst [vmem:[%s9 + $0x20] sm:$0xff] %v1417
    %1451 = vst [vmem:[%s9 + $0x28] sm:$0xff] %v1419
    %1452 = vst [vmem:[%s9 + $0x30] sm:$0xff] %v1422
    %1453 = vst [vmem:[%s9 + $0x38] sm:$0xff] %v1424
    %1454 = vst [vmem:[%s9 + $0x40] sm:$0xff] %v1427
    %1455 = vst [vmem:[%s9 + $0x48] sm:$0xff] %v1429
    %1456 = vst [vmem:[%s9 + $0x50] sm:$0xff] %v1432
    %1457 = vst [vmem:[%s9 + $0x58] sm:$0xff] %v1434
    %1458 = vst [vmem:[%s9 + $0x60] sm:$0xff] %v1437
    %1459 = vst [vmem:[%s9 + $0x68] sm:$0xff] %v1439
    %1460 = vst [vmem:[%s9 + $0x70] sm:$0xff] %v1442
    %1461 = vst [vmem:[%s9 + $0x78] sm:$0xff] %v1444
    // Predicated region
    $region62: #{_forward.1} parent=1 // pred_check
      _
    $region63: #{_forward.1} parent=1 // pred_check_branch
      %1463 = sbr.rel (0) target = $region65
    $region64: #{_forward.1} parent=1 // pred_region
      _
    $region65: #{_forward.1} parent=1 // pred_fallthru
      _
    // Predicated region
    $region66: #{_forward.1} parent=1 // pred_check
      _
    $region67: #{_forward.1} parent=1 // pred_check_branch
      %1465 = sbr.rel (0) target = $region69
    $region68: #{_forward.1} parent=1 // pred_region
      _
    $region69: #{_forward.1} parent=1 // pred_fallthru
      _
    %1466 = vsyncpa [#allocation3], 1
    %1467 = vsyncpa [#allocation5], 1
    %1468 = vsyncpa [#allocation8], 1
    %1469 = vsyncpa [#allocation11], 1

</llo_original>
